<compile_context>
chip_gen: v6e
topology: v6e:2x2x1
jax: 0.10.0
libtpu: 0.0.40
codegen_flags: <defaults>
</compile_context>

<pallas_src>
import functools

import numpy as np
import jax
import jax.numpy as jnp
from jax.experimental import pallas as pl
from jax.experimental.pallas import tpu as pltpu


def _focal_kernel(logits_ref, tgt_ref, out_ref, acc_ref, *,
                  gamma, alpha_vals, n_classes):
    h = pl.program_id(1)

    @pl.when(h == 0)
    def _():
        acc_ref[...] = jnp.zeros_like(acc_ref)

    x = logits_ref[...].astype(jnp.float32)       # (C, TH, W)
    tgt = tgt_ref[...]                            # (TH, W) int32

    # Numerically-stable log-softmax over the class axis (leading block dim:
    # pure per-vreg VPU max/add across C tiles, no cross-lane work).
    m = jnp.max(x, axis=0)                        # (TH, W)
    xs = x - m[None, :, :]                        # (C, TH, W)
    lse = jnp.log(jnp.sum(jnp.exp(xs), axis=0))   # (TH, W)

    # Gather the target-class shifted logit (and alpha weight) with per-class
    # selects; C is a small static constant for focal loss.
    xt = xs[0]
    at = None
    if alpha_vals is not None:
        at = jnp.full_like(m, float(alpha_vals[0]))
    for c in range(1, n_classes):
        sel = tgt == c
        xt = jnp.where(sel, xs[c], xt)
        if alpha_vals is not None:
            at = jnp.where(sel, float(alpha_vals[c]), at)

    logpt = xt - lse                              # (TH, W)
    pt = jnp.exp(logpt)
    if at is not None:
        logpt = logpt * at

    g = float(gamma)
    if g == 0.0:
        loss = -logpt                             # skip (1-pt)**0 entirely
    else:
        q = 1.0 - pt
        if g.is_integer() and 1.0 <= g <= 8.0:
            f = q                                 # repeated VPU multiplies
            for _ in range(int(g) - 1):
                f = f * q
        else:
            f = q ** g
        loss = -(f * logpt)

    # Lane-preserving partial accumulation: sublane reduce only, per step.
    acc_ref[...] += jnp.sum(loss, axis=0, keepdims=True)   # (1, W)

    # Once per image: cross-lane reduce + write the per-image partial sum into
    # element [0, 0] of this image's (8, 128) output tile (rest zeroed).
    @pl.when(h == pl.num_programs(1) - 1)
    def _():
        total = jnp.sum(acc_ref[...])
        r = jax.lax.broadcasted_iota(jnp.int32, out_ref.shape, 0)
        c = jax.lax.broadcasted_iota(jnp.int32, out_ref.shape, 1)
        out_ref[...] = jnp.where((r == 0) & (c == 0), total, 0.0)


def _pick_tile_h(H, C, W, budget_bytes=8 * 1024 * 1024):
    # Largest divisor of H that (a) is H itself or a multiple of 8 (block
    # sublane rule) and (b) keeps logits+target f32 blocks under budget.
    budget_elems = budget_bytes // 4 // max(C + 1, 1)
    cands = [t for t in range(1, H + 1)
             if H % t == 0 and (t == H or t % 8 == 0)]
    fitting = [t for t in cands if t * W <= budget_elems]
    return max(fitting) if fitting else min(cands)
    # TODO(synk): support ragged H tiles (mask tail rows) instead of requiring
    # tile_h to divide H.


def focal_loss(logits_nchw, target_nhw, *, gamma=0.0, alpha=None,
               size_average=True, tile_h=None):
    """FocalLoss forward. logits_nchw: (N, C, H, W) float, target_nhw: (N, H, W) int."""
    N, C, H, W = logits_nchw.shape
    M = N * H * W

    # alpha is a static module hyperparameter (as in the PyTorch __init__);
    # bake it into the kernel as constants (no per-step DMA, skipped if None).
    if alpha is None:
        alpha_vals = None
    elif isinstance(alpha, (float, int)):
        alpha_vals = (float(alpha), 1.0 - float(alpha))
    else:
        alpha_vals = tuple(float(v) for v in np.asarray(alpha).reshape(-1))
    if alpha_vals is not None:
        assert len(alpha_vals) >= C, (
            f"alpha has {len(alpha_vals)} entries but logits have C={C} classes")

    if tile_h is None:
        tile_h = _pick_tile_h(H, C, W)
    assert H % tile_h == 0 and (tile_h == H or tile_h % 8 == 0)
    grid = (N, H // tile_h)

    tgt = target_nhw.astype(jnp.int32)

    kernel = functools.partial(_focal_kernel, gamma=float(gamma),
                               alpha_vals=alpha_vals, n_classes=C)

    partials = pl.pallas_call(
        kernel,
        out_shape=jax.ShapeDtypeStruct((N * 8, 128), jnp.float32),
        grid_spec=pltpu.PrefetchScalarGridSpec(
            num_scalar_prefetch=0,
            grid=grid,
            in_specs=[
                # logits NCHW read directly: one image, all classes, a slab of
                # rows, full W (lane axis).
                pl.BlockSpec((None, C, tile_h, W), lambda n, h: (n, 0, h, 0)),
                pl.BlockSpec((None, tile_h, W), lambda n, h: (n, h, 0)),
            ],
            # One (8,128)-aligned partial-sum tile per image -> N axis can be
            # "parallel" (dual TensorCore on v7x); H axis is the sequential
            # accumulation axis.
            out_specs=pl.BlockSpec((8, 128), lambda n, h: (n, 0)),
            scratch_shapes=[pltpu.VMEM((1, W), jnp.float32)],
        ),
        compiler_params=pltpu.CompilerParams(
            dimension_semantics=("parallel", "arbitrary")),
    )(logits_nchw, tgt)

    loss_sum = jnp.sum(partials)
    if size_average:
        return loss_sum / M
    return loss_sum


def _reference_focal_loss(logits_nchw, target_nhw, gamma, alpha, size_average):
    N, C, H, W = logits_nchw.shape
    x = jnp.transpose(logits_nchw.reshape(N, C, H * W), (0, 2, 1)).reshape(-1, C)
    t = target_nhw.reshape(-1)
    logp = jax.nn.log_softmax(x.astype(jnp.float32), axis=-1)
    logpt = jnp.take_along_axis(logp, t[:, None], axis=1)[:, 0]
    pt = jnp.exp(logpt)
    if alpha is not None:
        a = jnp.array(alpha, dtype=jnp.float32)
        logpt = logpt * a[t]
    loss = -((1.0 - pt) ** gamma) * logpt
    return loss.mean() if size_average else loss.sum()


if __name__ == "__main__":
    key = jax.random.PRNGKey(0)
    k1, k2 = jax.random.split(key)

    N, C, H, W = 2, 4, 16, 16
    logits = jax.random.normal(k1, (N, C, H, W), dtype=jnp.float32)
    target = jax.random.randint(k2, (N, H, W), 0, C, dtype=jnp.int32)

    # Config 1: integer gamma + per-class alpha, size_average=True
    gamma = 2.0
    alpha = [0.1, 0.2, 0.3, 0.4]
    out = focal_loss(logits, target, gamma=gamma, alpha=alpha, size_average=True)
    out = jax.block_until_ready(out)
    ref = _reference_focal_loss(logits, target, gamma, alpha, True)
    assert jnp.allclose(out, ref, rtol=1e-5, atol=1e-5), (out, ref)

    # Config 2: gamma=0, no alpha, sum reduction (exercises the skip paths)
    out2 = focal_loss(logits, target, gamma=0.0, alpha=None, size_average=False)
    out2 = jax.block_until_ready(out2)
    ref2 = _reference_focal_loss(logits, target, 0.0, None, False)
    assert jnp.allclose(out2, ref2, rtol=1e-5, atol=1e-5), (out2, ref2)

    print("KERNEL_OK")
</pallas_src>

<mosaic_0001>
module attributes {stable_mosaic.version = 11 : i64} {
  func.func @_focal_kernel(%arg0: i32, %arg1: i32, %arg2: memref<1x4x16x16xf32, #tpu.memory_space<vmem>>, %arg3: memref<1x16x16xi32, #tpu.memory_space<vmem>>, %arg4: memref<8x128xf32, #tpu.memory_space<vmem>>, %arg5: memref<1x16xf32, #tpu.memory_space<vmem>>) attributes {dimension_semantics = [#tpu.dimension_semantics<parallel>, #tpu.dimension_semantics<arbitrary>], iteration_bounds = array<i64: 2, 1>, scalar_prefetch = 0 : i64, scratch_operands = 1 : i64, tpu.core_type = #tpu.core_type<tc>, window_params = [{transform_indices = @transform_0, window_bounds = array<i64: 1, 4, 16, 16>}, {transform_indices = @transform_1, window_bounds = array<i64: 1, 16, 16>}, {transform_indices = @transform_2, window_bounds = array<i64: 8, 128>}]} {
    %c0_i32 = arith.constant 0 : i32
    %0 = arith.cmpi eq, %arg1, %c0_i32 : i32
    %1 = arith.extui %0 : i1 to i32
    %c0_i32_0 = arith.constant 0 : i32
    %2 = arith.cmpi ne, %1, %c0_i32_0 : i32
    scf.if %2 {
      %cst_21 = arith.constant 0.000000e+00 : f32
      %55 = vector.broadcast %cst_21 : f32 to vector<1x16xf32>
      %c0_22 = arith.constant 0 : index
      %c0_23 = arith.constant 0 : index
      %56 = vector.load %arg5[%c0_22, %c0_23] : memref<1x16xf32, #tpu.memory_space<vmem>>, vector<1x16xf32>
      tpu.vector_store %arg5[%c0_22, %c0_23], %55 {strides = array<i32>} : memref<1x16xf32, #tpu.memory_space<vmem>>, vector<1x16xf32>,
    } else {
    }
    %c0 = arith.constant 0 : index
    %c0_1 = arith.constant 0 : index
    %c0_2 = arith.constant 0 : index
    %c0_3 = arith.constant 0 : index
    %3 = vector.load %arg2[%c0, %c0_1, %c0_2, %c0_3] : memref<1x4x16x16xf32, #tpu.memory_space<vmem>>, vector<1x4x16x16xf32>
    %4 = vector.shape_cast %3 : vector<1x4x16x16xf32> to vector<4x16x16xf32>
    %c0_4 = arith.constant 0 : index
    %c0_5 = arith.constant 0 : index
    %c0_6 = arith.constant 0 : index
    %5 = vector.load %arg3[%c0_4, %c0_5, %c0_6] : memref<1x16x16xi32, #tpu.memory_space<vmem>>, vector<1x16x16xi32>
    %6 = vector.shape_cast %5 : vector<1x16x16xi32> to vector<16x16xi32>
    %cst = arith.constant dense<0xFF800000> : vector<16x16xf32>
    %7 = vector.multi_reduction <maximumf>, %4, %cst [0] : vector<4x16x16xf32> to vector<16x16xf32>
    %8 = vector.shape_cast %7 : vector<16x16xf32> to vector<1x16x16xf32>
    %9 = vector.broadcast %8 : vector<1x16x16xf32> to vector<4x16x16xf32>
    %10 = arith.subf %4, %9 : vector<4x16x16xf32>
    %11 = math.exp %10 : vector<4x16x16xf32>
    %cst_7 = arith.constant dense<0.000000e+00> : vector<16x16xf32>
    %12 = vector.multi_reduction <add>, %11, %cst_7 [0] : vector<4x16x16xf32> to vector<16x16xf32>
    %13 = math.log %12 : vector<16x16xf32>
    %14 = vector.extract_strided_slice %10 {offsets = [0, 0, 0], sizes = [1, 16, 16], strides = [1, 1, 1]} : vector<4x16x16xf32> to vector<1x16x16xf32>
    %15 = vector.shape_cast %14 : vector<1x16x16xf32> to vector<16x16xf32>
    %cst_8 = arith.constant 1.000000e-01 : f32
    %16 = vector.broadcast %cst_8 : f32 to vector<16x16xf32>
    %c1_i32 = arith.constant 1 : i32
    %17 = vector.broadcast %c1_i32 : i32 to vector<16x16xi32>
    %18 = arith.cmpi eq, %6, %17 : vector<16x16xi32>
    %19 = vector.extract_strided_slice %10 {offsets = [1, 0, 0], sizes = [1, 16, 16], strides = [1, 1, 1]} : vector<4x16x16xf32> to vector<1x16x16xf32>
    %20 = vector.shape_cast %19 : vector<1x16x16xf32> to vector<16x16xf32>
    %21 = arith.select %18, %20, %15 : vector<16x16xi1>, vector<16x16xf32>
    %cst_9 = arith.constant 2.000000e-01 : f32
    %22 = vector.broadcast %cst_9 : f32 to vector<16x16xf32>
    %23 = arith.select %18, %22, %16 : vector<16x16xi1>, vector<16x16xf32>
    %c2_i32 = arith.constant 2 : i32
    %24 = vector.broadcast %c2_i32 : i32 to vector<16x16xi32>
    %25 = arith.cmpi eq, %6, %24 : vector<16x16xi32>
    %26 = vector.extract_strided_slice %10 {offsets = [2, 0, 0], sizes = [1, 16, 16], strides = [1, 1, 1]} : vector<4x16x16xf32> to vector<1x16x16xf32>
    %27 = vector.shape_cast %26 : vector<1x16x16xf32> to vector<16x16xf32>
    %28 = arith.select %25, %27, %21 : vector<16x16xi1>, vector<16x16xf32>
    %cst_10 = arith.constant 3.000000e-01 : f32
    %29 = vector.broadcast %cst_10 : f32 to vector<16x16xf32>
    %30 = arith.select %25, %29, %23 : vector<16x16xi1>, vector<16x16xf32>
    %c3_i32 = arith.constant 3 : i32
    %31 = vector.broadcast %c3_i32 : i32 to vector<16x16xi32>
    %32 = arith.cmpi eq, %6, %31 : vector<16x16xi32>
    %33 = vector.extract_strided_slice %10 {offsets = [3, 0, 0], sizes = [1, 16, 16], strides = [1, 1, 1]} : vector<4x16x16xf32> to vector<1x16x16xf32>
    %34 = vector.shape_cast %33 : vector<1x16x16xf32> to vector<16x16xf32>
    %35 = arith.select %32, %34, %28 : vector<16x16xi1>, vector<16x16xf32>
    %cst_11 = arith.constant 4.000000e-01 : f32
    %36 = vector.broadcast %cst_11 : f32 to vector<16x16xf32>
    %37 = arith.select %32, %36, %30 : vector<16x16xi1>, vector<16x16xf32>
    %38 = arith.subf %35, %13 : vector<16x16xf32>
    %39 = math.exp %38 : vector<16x16xf32>
    %40 = arith.mulf %38, %37 : vector<16x16xf32>
    %cst_12 = arith.constant 1.000000e+00 : f32
    %41 = vector.broadcast %cst_12 : f32 to vector<16x16xf32>
    %42 = arith.subf %41, %39 : vector<16x16xf32>
    %43 = arith.mulf %42, %42 : vector<16x16xf32>
    %44 = arith.mulf %43, %40 : vector<16x16xf32>
    %cst_13 = arith.constant 0.000000e+00 : f32
    %45 = vector.broadcast %cst_13 : f32 to vector<16x16xf32>
    %46 = arith.subf %45, %44 : vector<16x16xf32>
    %c0_14 = arith.constant 0 : index
    %c0_15 = arith.constant 0 : index
    %47 = vector.load %arg5[%c0_14, %c0_15] : memref<1x16xf32, #tpu.memory_space<vmem>>, vector<1x16xf32>
    %cst_16 = arith.constant dense<0.000000e+00> : vector<16xf32>
    %48 = vector.multi_reduction <add>, %46, %cst_16 [0] : vector<16x16xf32> to vector<16xf32>
    %49 = vector.shape_cast %48 : vector<16xf32> to vector<1x16xf32>
    %50 = arith.addf %47, %49 : vector<1x16xf32>
    %c0_17 = arith.constant 0 : index
    %c0_18 = arith.constant 0 : index
    %51 = vector.load %arg5[%c0_17, %c0_18] : memref<1x16xf32, #tpu.memory_space<vmem>>, vector<1x16xf32>
    tpu.vector_store %arg5[%c0_17, %c0_18], %50 {strides = array<i32>} : memref<1x16xf32, #tpu.memory_space<vmem>>, vector<1x16xf32>,
    %c0_i32_19 = arith.constant 0 : i32
    %52 = arith.cmpi eq, %arg1, %c0_i32_19 : i32
    %53 = arith.extui %52 : i1 to i32
    %c0_i32_20 = arith.constant 0 : i32
    %54 = arith.cmpi ne, %53, %c0_i32_20 : i32
    scf.if %54 {
      %c0_21 = arith.constant 0 : index
      %c0_22 = arith.constant 0 : index
      %55 = vector.load %arg5[%c0_21, %c0_22] : memref<1x16xf32, #tpu.memory_space<vmem>>, vector<1x16xf32>
      %56 = vector.shape_cast %55 : vector<1x16xf32> to vector<1x1x16xf32>
      %cst_23 = arith.constant dense<0.000000e+00> : vector<1xf32>
      %57 = vector.multi_reduction <add>, %56, %cst_23 [1, 2] : vector<1x1x16xf32> to vector<1xf32>
      %58 = vector.shape_cast %57 : vector<1xf32> to vector<1x1x1xf32>
      %59 = vector.extract %58[0, 0, 0] : f32 from vector<1x1x1xf32>
      %60 = tpu.iota {dimensions = array<i32: 0>} : vector<8x128xi32>
      %61 = tpu.iota {dimensions = array<i32: 1>} : vector<8x128xi32>
      %c0_i32_24 = arith.constant 0 : i32
      %62 = vector.broadcast %c0_i32_24 : i32 to vector<8x128xi32>
      %63 = arith.cmpi eq, %60, %62 : vector<8x128xi32>
      %c0_i32_25 = arith.constant 0 : i32
      %64 = vector.broadcast %c0_i32_25 : i32 to vector<8x128xi32>
      %65 = arith.cmpi eq, %61, %64 : vector<8x128xi32>
      %66 = arith.andi %63, %65 : vector<8x128xi1>
      %cst_26 = arith.constant 0.000000e+00 : f32
      %67 = vector.broadcast %59 : f32 to vector<8x128xf32>
      %68 = vector.broadcast %cst_26 : f32 to vector<8x128xf32>
      %69 = arith.select %66, %67, %68 : vector<8x128xi1>, vector<8x128xf32>
      %c0_27 = arith.constant 0 : index
      %c0_28 = arith.constant 0 : index
      %70 = vector.load %arg4[%c0_27, %c0_28] : memref<8x128xf32, #tpu.memory_space<vmem>>, vector<8x128xf32>
      tpu.vector_store %arg4[%c0_27, %c0_28], %69 {strides = array<i32>} : memref<8x128xf32, #tpu.memory_space<vmem>>, vector<8x128xf32>,
    } else {
    }
    return
  }
  func.func @transform_0(%arg0: i32, %arg1: i32) -> (i32, i32, i32, i32) {
    %c0_i32 = arith.constant 0 : i32
    %c0_i32_0 = arith.constant 0 : i32
    %c0_i32_1 = arith.constant 0 : i32
    return %arg0, %c0_i32, %arg1, %c0_i32_0 : i32, i32, i32, i32
  }
  func.func @transform_1(%arg0: i32, %arg1: i32) -> (i32, i32, i32) {
    %c0_i32 = arith.constant 0 : i32
    %c0_i32_0 = arith.constant 0 : i32
    return %arg0, %arg1, %c0_i32 : i32, i32, i32
  }
  func.func @transform_2(%arg0: i32, %arg1: i32) -> (i32, i32) {
    %c0_i32 = arith.constant 0 : i32
    %c0_i32_0 = arith.constant 0 : i32
    return %arg0, %c0_i32 : i32, i32
  }
}

</mosaic_0001>

<llo_original>
// kernel: tpu_custom_call.1
$region0: #{tpu_custom_call.1}
  #allocation0 [shape = 'u32[]', space=smem, size = 0x4, offset = 0x4, fixed_abs, tag = 'smem constant byte address 0x4 - core index']
  #allocation1 [shape = 'u32[144,128]{1,0:T(1,128)}', space=vmem, size = 0x12000, scoped, tag = 'internal scratch']
  #allocation2 [shape = 'f32[1,16]{1,0:T(1,128)}', space=vmem, size = 0x200, scoped, tag = 'scratch operand']
  %s0 = inlined_call_operand.hbm [shape: f32[2,4,16,16], index: 0, kind: input, shape index: {}]
  %s1 = inlined_call_operand.hbm [shape: s32[2,16,16], index: 1, kind: input, shape index: {}]
  %s2 = inlined_call_operand.hbm [shape: f32[16,128], index: 2, kind: output, shape index: {}]
  %s3 = sld [smem:[#allocation0]]
  $region57: #{tpu_custom_call.1} parent=0
    _
  %s5 = ssub.s32 1, %s3
  %s6 = scalar_select 0, %s5, %s3
  $region1: #{tpu_custom_call.1} parent=0
    #allocation3 [shape = 'u8[65536]{0}', space=vmem, size = 0x10000, scoped, tag = 'input window, operand 0']
    #allocation4 [shape = 's32[2]{0}', space=sflag, size = 0x8, scoped, tag = 'scoped memory for tpu_custom_call.1']
    #allocation5 [shape = 's32[2]{0}', space=sflag, size = 0x8, scoped, tag = 'scoped memory for tpu_custom_call.1']
    #allocation6 [shape = 'u8[16384]{0}', space=vmem, size = 0x4000, scoped, tag = 'input window, operand 1']
    #allocation7 [shape = 's32[2]{0}', space=sflag, size = 0x8, scoped, tag = 'scoped memory for tpu_custom_call.1']
    #allocation8 [shape = 'u8[8192]{0}', space=vmem, size = 0x2000, scoped, tag = 'output window, operand 0']
    %7 = vsyncpa [#allocation4], 0
    %s8 = scalar_lea.sflag [#allocation4], 1
    %9 = vsyncpa %s8, 0
    %10 = vsyncpa [#allocation7], 0
    %s11 = scalar_lea.sflag [#allocation7], 1
    %12 = vsyncpa %s11, 0
    %13 = vsyncpa [#allocation5], 0
    %s14 = scalar_lea.sflag [#allocation5], 1
    %15 = vsyncpa %s14, 0
    loop: start=0, step=1, limit=4
    $region2: #{tpu_custom_call.1} parent=1 // loop_pre_header
      _
    $region3: #{tpu_custom_call.1} parent=1 // loop_header
      %s17 = sphi 0, %s21
      %p18 = scmp.ge.s32.totalorder %s17, 4
      %s24 = sphi 0, %s36
      %s25 = sphi 0, %s32
      %s26 = sphi 0, %s24
      %s27 = sphi 0, %s25
      %s28 = sphi 0, %s26
      %s29 = sphi 0, %s27
      %s41 = sphi 0, %s43
      %s44 = sphi 0, %s41
      %s45 = sphi 0, %s44
      %s61 = sphi 0, %s45
      %s69 = sphi 0, %s71
      %s72 = sphi 0, %s69
      %s73 = sphi 0, %s72
      %s89 = sphi 0, %s73
      %s95 = sphi 0, %s97
      %s98 = sphi 0, %s95
      %s99 = sphi 0, %s98
      %s115 = sphi 0, %s99
    $region4: #{tpu_custom_call.1} parent=1 // loop_header_branch
      %20 = sbr.rel (%p18) target = $region8
    $region5: #{tpu_custom_call.1} parent=1 // loop_body
      %s22 = ssub.s32 %s17, 1
      %s23 = ssub.s32 %s17, 2
      %s30 = sadd.s32 1, %s25
      %p31 = scmp.ge.s32.totalorder %s30, 1
      %s32 = scalar_select %p31, 0, %s30
      %s33 = sadd.s32 1, %s24
      %s34 = scalar_select %p31, %s33, %s24
      %p35 = scmp.ge.s32.totalorder %s34, 2
      %s36 = scalar_select %p35, 0, %s34
      %s37 = ssub.s32 %s24, %s36
      %s38 = ssub.s32 %s25, %s32
      %s39 = sor.u32 %s37, %s38
      %p40 = scmp.eq.s32.totalorder %s39, 0
      %s42 = sadd.s32 %s41, 1
      %s43 = scalar_select %p40, %s41, %s42
      %p46 = pneg %p40
      %p47 = scmp.eq.s32.totalorder %s17, 1
      %p48 = por %p46, %p47
      %p49 = scmp.ne.s32.totalorder %s41, %s44
      %p50 = scmp.eq.s32.totalorder %s17, 0
      %p51 = por %p49, %p50
      %p52 = scmp.ne.s32.totalorder %s41, %s44
      %p53 = scmp.eq.s32.totalorder %s22, 1
      %p54 = por %p52, %p53
      %p55 = scmp.ne.s32.totalorder %s44, %s45
      %p56 = scmp.eq.s32.totalorder %s22, 0
      %p57 = por %p55, %p56
      %p58 = scmp.ne.s32.totalorder %s44, %s45
      %p59 = scmp.eq.s32.totalorder %s23, 1
      %p60 = por %p58, %p59
      %p62 = scmp.ne.s32.totalorder %s45, %s61
      %p63 = scmp.eq.s32.totalorder %s23, 0
      %p64 = por %p62, %p63
      %s65 = ssub.s32 %s24, %s36
      %s66 = ssub.s32 %s25, %s32
      %s67 = sor.u32 %s65, %s66
      %p68 = scmp.eq.s32.totalorder %s67, 0
      %s70 = sadd.s32 %s69, 1
      %s71 = scalar_select %p68, %s69, %s70
      %p74 = pneg %p68
      %p75 = scmp.eq.s32.totalorder %s17, 1
      %p76 = por %p74, %p75
      %p77 = scmp.ne.s32.totalorder %s69, %s72
      %p78 = scmp.eq.s32.totalorder %s17, 0
      %p79 = por %p77, %p78
      %p80 = scmp.ne.s32.totalorder %s69, %s72
      %p81 = scmp.eq.s32.totalorder %s22, 1
      %p82 = por %p80, %p81
      %p83 = scmp.ne.s32.totalorder %s72, %s73
      %p84 = scmp.eq.s32.totalorder %s22, 0
      %p85 = por %p83, %p84
      %p86 = scmp.ne.s32.totalorder %s72, %s73
      %p87 = scmp.eq.s32.totalorder %s23, 1
      %p88 = por %p86, %p87
      %p90 = scmp.ne.s32.totalorder %s73, %s89
      %p91 = scmp.eq.s32.totalorder %s23, 0
      %p92 = por %p90, %p91
      %s93 = ssub.s32 %s24, %s36
      %p94 = scmp.eq.s32.totalorder %s93, 0
      %s96 = sadd.s32 %s95, 1
      %s97 = scalar_select %p94, %s95, %s96
      %p100 = pneg %p94
      %p101 = scmp.eq.s32.totalorder %s17, 1
      %p102 = por %p100, %p101
      %p103 = scmp.ne.s32.totalorder %s95, %s98
      %p104 = scmp.eq.s32.totalorder %s17, 0
      %p105 = por %p103, %p104
      %p106 = scmp.ne.s32.totalorder %s95, %s98
      %p107 = scmp.eq.s32.totalorder %s22, 1
      %p108 = por %p106, %p107
      %p109 = scmp.ne.s32.totalorder %s98, %s99
      %p110 = scmp.eq.s32.totalorder %s22, 0
      %p111 = por %p109, %p110
      %p112 = scmp.ne.s32.totalorder %s98, %s99
      %p113 = scmp.eq.s32.totalorder %s23, 1
      %p114 = por %p112, %p113
      %p116 = scmp.ne.s32.totalorder %s99, %s115
      %p117 = scmp.eq.s32.totalorder %s23, 0
      %p118 = por %p116, %p117
      %p119 = scmp.le.s32.totalorder 1, %s17
      %p120 = scmp.lt.s32.totalorder %s17, 3
      %p121 = pnand %p119, %p120
      %p122 = pneg %p121
      // Predicated region
      $region9: #{tpu_custom_call.1} parent=5 // pred_check
        _
      $region10: #{tpu_custom_call.1} parent=5 // pred_check_branch
        %124 = sbr.rel (%p121) target = $region12
      $region11: #{tpu_custom_call.1} parent=5 // pred_region
        %s125 = ssub.s32 %s17, 1
      $region12: #{tpu_custom_call.1} parent=5 // pred_fallthru
        _
      %p126 = scmp.lt.s32.totalorder %s17, 2
      // Predicated region
      $region13: #{tpu_custom_call.1} parent=5 // pred_check
        %p127 = pneg %p126
      $region14: #{tpu_custom_call.1} parent=5 // pred_check_branch
        %129 = sbr.rel (%p127) target = $region16
      $region15: #{tpu_custom_call.1} parent=5 // pred_region
        // Predicated region
        $region17: #{tpu_custom_call.1} parent=15 // pred_check
          %p130 = pneg %p51
        $region18: #{tpu_custom_call.1} parent=15 // pred_check_branch
          %132 = sbr.rel (%p130) target = $region20
        $region19: #{tpu_custom_call.1} parent=15 // pred_region
          %s133 = sand.u32 %s41, 1
          %s134 = scalar_lea.sflag [#allocation4], %s133
          %s135 = sand.u32 %s41, 1
          %s136 = smul.addr %s135, 64
          %s137 = scalar_lea.vmem [#allocation3], %s136
          %s138 = smul.u32 2, %s25
          %s140 = ssub.s32 1024, 1024
          %141 = vsyncadd %s134, %s140
          %s142 = smul.addr %s24, 8
          %s143 = sadd.s32 %s138, %s142
          %s144 = smul.addr %s143, 128
          %s145 = scalar_lea.hbm %s0, %s144
          %s146 = sshll.u32 %s137, 4
          %s147 = int_to_ptr.vmem [resolvable:$true] %s146
          %152 = dma.hbm_to_vmem [thread:$0]  %s145, 1024, %s147, %s134, 128, 128, 8
        $region20: #{tpu_custom_call.1} parent=15 // pred_fallthru
          _
        // Predicated region
        $region21: #{tpu_custom_call.1} parent=15 // pred_check
          %p153 = pneg %p79
        $region22: #{tpu_custom_call.1} parent=15 // pred_check_branch
          %155 = sbr.rel (%p153) target = $region24
        $region23: #{tpu_custom_call.1} parent=15 // pred_region
          %s156 = sand.u32 %s69, 1
          %s157 = scalar_lea.sflag [#allocation7], %s156
          %s158 = sand.u32 %s69, 1
          %s159 = smul.addr %s158, 16
          %s160 = scalar_lea.vmem [#allocation6], %s159
          %s161 = smul.u32 2, %s25
          %s163 = ssub.s32 256, 256
          %164 = vsyncadd %s157, %s163
          %s165 = smul.addr %s24, 2
          %s166 = sadd.s32 %s161, %s165
          %s167 = smul.addr %s166, 128
          %s168 = scalar_lea.hbm %s1, %s167
          %s169 = sshll.u32 %s160, 4
          %s170 = int_to_ptr.vmem [resolvable:$true] %s169
          %175 = dma.hbm_to_vmem [thread:$0]  %s168, 256, %s170, %s157, 128, 128, 8
        $region24: #{tpu_custom_call.1} parent=15 // pred_fallthru
          _
      $region16: #{tpu_custom_call.1} parent=5 // pred_fallthru
        _
      %p176 = scmp.le.s32.totalorder 1, %s17
      %p177 = scmp.lt.s32.totalorder %s17, 3
      %p178 = pnand %p176, %p177
      %p179 = pneg %p178
      // Predicated region
      $region25: #{tpu_custom_call.1} parent=5 // pred_check
        _
      $region26: #{tpu_custom_call.1} parent=5 // pred_check_branch
        %181 = sbr.rel (%p178) target = $region28
      $region27: #{tpu_custom_call.1} parent=5 // pred_region
        %s182 = ssub.s32 %s17, 1
        %s183 = sand.u32 %s44, 1
        %s184 = scalar_lea.sflag [#allocation4], %s183
        %s185 = sand.u32 %s44, 1
        %s186 = smul.addr %s185, 64
        %s187 = scalar_lea.vmem [#allocation3], %s186
        // Predicated region
        $region29: #{tpu_custom_call.1} parent=27 // pred_check
          %p188 = pneg %p57
        $region30: #{tpu_custom_call.1} parent=27 // pred_check_branch
          %190 = sbr.rel (%p188) target = $region32
        $region31: #{tpu_custom_call.1} parent=27 // pred_region
          %191 = dma.done %s184, 1024
        $region32: #{tpu_custom_call.1} parent=27 // pred_fallthru
          _
        %s192 = sand.u32 %s72, 1
        %s193 = scalar_lea.sflag [#allocation7], %s192
        %s194 = sand.u32 %s72, 1
        %s195 = smul.addr %s194, 16
        %s196 = scalar_lea.vmem [#allocation6], %s195
        // Predicated region
        $region33: #{tpu_custom_call.1} parent=27 // pred_check
          %p197 = pneg %p85
        $region34: #{tpu_custom_call.1} parent=27 // pred_check_branch
          %199 = sbr.rel (%p197) target = $region36
        $region35: #{tpu_custom_call.1} parent=27 // pred_region
          %200 = dma.done %s193, 256
        $region36: #{tpu_custom_call.1} parent=27 // pred_fallthru
          _
        %s201 = sand.u32 %s44, 1
        %s202 = scalar_lea.sflag [#allocation4], %s201
        %s203 = sand.u32 %s44, 1
        %s204 = smul.addr %s203, 64
        %s205 = scalar_lea.vmem [#allocation3], %s204
        %p206 = pneg %p57
        %p207 = pneg %p54
        %s208 = sand.u32 %s72, 1
        %s209 = scalar_lea.sflag [#allocation7], %s208
        %s210 = sand.u32 %s72, 1
        %s211 = smul.addr %s210, 16
        %s212 = scalar_lea.vmem [#allocation6], %s211
        %p213 = pneg %p85
        %p214 = pneg %p82
        %p215 = pneg %p111
        %p216 = pneg %p108
        %s217 = sand.u32 %s98, 1
        %s218 = scalar_lea.sflag [#allocation5], %s217
        %s219 = sand.u32 %s98, 1
        %s220 = smul.addr %s219, 8
        %s221 = scalar_lea.vmem [#allocation8], %s220
        %s222 = smul.u32 2, %s27
        %s223 = smul.u32 2, %s27
        %p224 = scmp.eq.s32.totalorder %s27, 0
        // Predicated region
        $region37: #{tpu_custom_call.1} parent=27 // pred_check
          %p225 = pneg %p224
        $region38: #{tpu_custom_call.1} parent=27 // pred_check_branch
          %227 = sbr.rel (%p225) target = $region40
        $region39: #{tpu_custom_call.1} parent=27 // pred_region
          %vm228 = vcmask 122880
          %229 = vst.msk [vmem:[#allocation2] sm:$0x1] %vm228, 0.0
        $region40: #{tpu_custom_call.1} parent=27 // pred_fallthru
          _
        %v230 = vld [vmem:[%s187] sm:$0xff]
        %v231 = vld [vmem:[%s187 + $0x8] sm:$0xff]
        %v232 = vld [vmem:[%s187 + $0x10] sm:$0xff]
        %v233 = vld [vmem:[%s187 + $0x18] sm:$0xff]
        %v234 = vld [vmem:[%s187 + $0x20] sm:$0xff]
        %v235 = vld [vmem:[%s187 + $0x28] sm:$0xff]
        %v236 = vld [vmem:[%s187 + $0x30] sm:$0xff]
        %v237 = vld [vmem:[%s187 + $0x38] sm:$0xff]
        %v238 = vld [vmem:[%s196] sm:$0xff]
        %v239 = vld [vmem:[%s196 + $0x8] sm:$0xff]
        %vm240 = vcmask 130048
        %v241 = vsel %vm240, %v230, -inf
        %v242 = vsel %vm240, %v232, -inf
        %v243 = vsel %vm240, %v234, -inf
        %v244 = vmax.f32 %v241, %v243
        %v245 = vsel %vm240, %v236, -inf
        %v246 = vmax.f32 %v242, %v245
        %v247 = vmax.f32 %v244, %v246
        %v248 = vsel %vm240, %v231, -inf
        %v249 = vsel %vm240, %v233, -inf
        %v250 = vsel %vm240, %v235, -inf
        %v251 = vmax.f32 %v248, %v250
        %v252 = vsel %vm240, %v237, -inf
        %v253 = vmax.f32 %v249, %v252
        %v254 = vmax.f32 %v251, %v253
        %v255 = vsub.f32 %v230, %v247
        %v256 = vsub.f32 %v231, %v254
        %v257 = vsub.f32 %v232, %v247
        %v258 = vsub.f32 %v233, %v254
        %v259 = vsub.f32 %v234, %v247
        %v260 = vsub.f32 %v235, %v254
        %v261 = vsub.f32 %v236, %v247
        %v262 = vsub.f32 %v237, %v254
        %v263 = vmul.f32 %v255, 1.442695
        %v264 = vpow.pop %v263
        %v265 = vmul.f32 %v256, 1.442695
        %v266 = vpow.pop %v265
        %v267 = vmul.f32 %v257, 1.442695
        %v268 = vpow.pop %v267
        %v269 = vmul.f32 %v258, 1.442695
        %v270 = vpow.pop %v269
        %v271 = vmul.f32 %v259, 1.442695
        %v272 = vpow.pop %v271
        %v273 = vmul.f32 %v260, 1.442695
        %v274 = vpow.pop %v273
        %v275 = vmul.f32 %v261, 1.442695
        %v276 = vpow.pop %v275
        %v277 = vmul.f32 %v262, 1.442695
        %v278 = vpow.pop %v277
        %v279 = vsel %vm240, %v264, 0.0
        %v280 = vsel %vm240, %v268, 0.0
        %v281 = vadd.f32 %v279, %v280
        %v282 = vsel %vm240, %v272, 0.0
        %v283 = vadd.f32 %v281, %v282
        %v284 = vsel %vm240, %v276, 0.0
        %v285 = vadd.f32 %v283, %v284
        %v286 = vsel %vm240, %v266, 0.0
        %v287 = vsel %vm240, %v270, 0.0
        %v288 = vadd.f32 %v286, %v287
        %v289 = vsel %vm240, %v274, 0.0
        %v290 = vadd.f32 %v288, %v289
        %v291 = vsel %vm240, %v278, 0.0
        %v292 = vadd.f32 %v290, %v291
        %v293 = vlog2.pop %v285
        %v294 = vmul.f32 %v293, 0.6931472
        %v295 = vlog2.pop %v292
        %v296 = vmul.f32 %v295, 0.6931472
        %vm297 = vcmp.eq.s32.totalorder %v238, 1
        %vm298 = vcmp.eq.s32.totalorder %v239, 1
        %v299 = vsel %vm297, %v257, %v255
        %v300 = vsel %vm298, %v258, %v256
        %v301 = vsel %vm297, 0.2, 0.1
        %v302 = vsel %vm298, 0.2, 0.1
        %vm303 = vcmp.eq.s32.totalorder %v238, 2
        %vm304 = vcmp.eq.s32.totalorder %v239, 2
        %v305 = vsel %vm303, %v259, %v299
        %v306 = vsel %vm304, %v260, %v300
        %v307 = vsel %vm303, 0.3, %v301
        %v308 = vsel %vm304, 0.3, %v302
        %vm309 = vcmp.eq.s32.totalorder %v238, 3
        %vm310 = vcmp.eq.s32.totalorder %v239, 3
        %v311 = vsel %vm309, %v261, %v305
        %v312 = vsel %vm310, %v262, %v306
        %v313 = vsel %vm309, 0.4, %v307
        %v314 = vsel %vm310, 0.4, %v308
        %v315 = vsub.f32 %v311, %v294
        %v316 = vsub.f32 %v312, %v296
        %v317 = vmul.f32 %v315, 1.442695
        %v318 = vpow.pop %v317
        %v319 = vmul.f32 %v316, 1.442695
        %v320 = vpow.pop %v319
        %v321 = vmul.f32 %v315, %v313
        %v322 = vmul.f32 %v316, %v314
        %v323 = vsub.f32 1.0, %v318
        %v324 = vsub.f32 1.0, %v320
        %v325 = vmul.f32 %v323, %v323
        %v326 = vmul.f32 %v324, %v324
        %v327 = vmul.f32 %v325, %v321
        %v328 = vmul.f32 %v326, %v322
        %v329 = vsub.f32 0.0, %v327
        %v330 = vsub.f32 0.0, %v328
        %v331 = vld [vmem:[#allocation2] sm:$0x1]
        %v332 = vsel %vm240, %v329, 0.0
        %v333 = vsel %vm240, %v330, 0.0
        %v334 = vadd.f32 %v332, %v333
        %v335 = vrot.slane %v334, 4
        %v336 = vadd.f32 %v334, %v335
        %v337 = vrot.slane %v336, 2
        %v338 = vadd.f32 %v336, %v337
        %v339 = vrot.slane %v338, 1
        %v340 = vadd.f32 %v338, %v339
        %v341 = vadd.f32 %v331, %v340
        %vm342 = vcmask 122880
        %343 = vst.msk [vmem:[#allocation2] sm:$0x1] %vm342, %v341
        // Predicated region
        $region41: #{tpu_custom_call.1} parent=27 // pred_check
          %p344 = pneg %p224
        $region42: #{tpu_custom_call.1} parent=27 // pred_check_branch
          %346 = sbr.rel (%p344) target = $region44
        $region43: #{tpu_custom_call.1} parent=27 // pred_region
          %v347 = vld [vmem:[#allocation2] sm:$0x1]
          %v348 = vsel %vm342, %v347, 0.0
          %349 = vadd.xlane.f32.xlu0 %v348
          %v350 = vpop.xlane.xlu0 %349
          %v351 = vrot.slane %v350, 4
          %v352 = vadd.f32 %v350, %v351
          %v353 = vrot.slane %v352, 2
          %v354 = vadd.f32 %v352, %v353
          %v355 = vrot.slane %v354, 1
          %v356 = vadd.f32 %v354, %v355
          %s357 = vtos %v356
          %v358 = vlaneseq
          %v359 = vshrl.u32 %v358, 7
          %v360 = vlaneseq
          %v361 = vand.u32 %v360, 127
          %vm362 = vcmp.eq.s32.totalorder %v359, 0
          %vm363 = vcmp.eq.s32.totalorder %v361, 0
          %vm364 = vmand %vm362, %vm363
          %v365 = vstv %s357
          %v366 = vsel %vm364, %v365, 0.0
          %367 = vst [vmem:[%s221] sm:$0xff] %v366
        $region44: #{tpu_custom_call.1} parent=27 // pred_fallthru
          _
        %s368 = sand.u32 %s98, 1
        %s369 = scalar_lea.sflag [#allocation5], %s368
        %s370 = sand.u32 %s98, 1
        %s371 = smul.addr %s370, 8
        %s372 = scalar_lea.vmem [#allocation8], %s371
        // Predicated region
        $region45: #{tpu_custom_call.1} parent=27 // pred_check
          %p373 = pneg %p108
        $region46: #{tpu_custom_call.1} parent=27 // pred_check_branch
          %375 = sbr.rel (%p373) target = $region48
        $region47: #{tpu_custom_call.1} parent=27 // pred_region
          %s377 = ssub.s32 128, 128
          %378 = vsyncadd %s369, %s377
          %s379 = smul.addr %s26, 128
          %s380 = scalar_lea.hbm %s2, %s379
          %s382 = sshll.u32 %s372, 4
          %s383 = int_to_ptr.vmem [resolvable:$true] %s382
          %385 = dma.vmem_to_hbm [thread:$0]  %s383, 128, %s380, %s369
        $region48: #{tpu_custom_call.1} parent=27 // pred_fallthru
          _
      $region28: #{tpu_custom_call.1} parent=5 // pred_fallthru
        _
      %p386 = scmp.le.s32.totalorder 2, %s17
      // Predicated region
      $region49: #{tpu_custom_call.1} parent=5 // pred_check
        %p387 = pneg %p386
      $region50: #{tpu_custom_call.1} parent=5 // pred_check_branch
        %389 = sbr.rel (%p387) target = $region52
      $region51: #{tpu_custom_call.1} parent=5 // pred_region
        %s390 = ssub.s32 %s17, 2
        // Predicated region
        $region53: #{tpu_custom_call.1} parent=51 // pred_check
          %p391 = pneg %p114
        $region54: #{tpu_custom_call.1} parent=51 // pred_check_branch
          %393 = sbr.rel (%p391) target = $region56
        $region55: #{tpu_custom_call.1} parent=51 // pred_region
          %s394 = sand.u32 %s99, 1
          %s395 = scalar_lea.sflag [#allocation5], %s394
          %s396 = sand.u32 %s99, 1
          %s397 = smul.addr %s396, 8
          %s398 = scalar_lea.vmem [#allocation8], %s397
          %399 = dma.done %s395, 128
        $region56: #{tpu_custom_call.1} parent=51 // pred_fallthru
          _
      $region52: #{tpu_custom_call.1} parent=5 // pred_fallthru
        _
    $region6: #{tpu_custom_call.1} parent=1 // loop_footer
      %s21 = sadd.s32 1, %s17
    $region7: #{tpu_custom_call.1} parent=1 // loop_footer_branch
      %16 = sbr.rel target = $region3
    $region8: #{tpu_custom_call.1} parent=1 // loop_exit
      _
    %400 = vsyncpa [#allocation4], 1
    %s401 = scalar_lea.sflag [#allocation4], 1
    %402 = vsyncpa %s401, 1
    %403 = vsyncpa [#allocation7], 1
    %s404 = scalar_lea.sflag [#allocation7], 1
    %405 = vsyncpa %s404, 1
    %406 = vsyncpa [#allocation5], 1
    %s407 = scalar_lea.sflag [#allocation5], 1
    %408 = vsyncpa %s407, 1

</llo_original>
